<compile_context>
chip_gen: v7x
topology: tpu7x:2x2x1
jax: 0.10.0
libtpu: 0.0.40
codegen_flags: <defaults>
</compile_context>

<pallas_src>
import functools
import math

import jax
import jax.numpy as jnp
from jax.experimental import pallas as pl
from jax.experimental.pallas import tpu as pltpu

_EPS = 1e-5


# ------------------------------ shared helpers ------------------------------ #
def _rmsnorm(v, w, eps=_EPS):
    var = jnp.mean(v * v, axis=-1, keepdims=True)
    return v * jax.lax.rsqrt(var + eps) * w


def _rope_partner(x, n_heads, head_dim):
    """Partner columns for full-width RoPE in the per-head [re | im] layout."""
    hd2 = head_dim // 2
    parts = []
    for h in range(n_heads):
        lo = h * head_dim
        parts.append(x[:, lo + hd2:lo + head_dim])   # im  (partner of re cols)
        parts.append(x[:, lo:lo + hd2])              # re  (partner of im cols)
    return jnp.concatenate(parts, axis=1)


# --------------------------- K/V projection kernel -------------------------- #
def kv_project_kernel(x_ref, cosk_ref, sink_ref, anorm_ref, wkv_ref,
                      kt_ref, v_ref, *, n_heads, head_dim, eps):
    H = n_heads * head_dim
    x = x_ref[0]                                              # (tk, H) f32
    h = _rmsnorm(x, anorm_ref[...], eps).astype(jnp.bfloat16)
    kv = jnp.dot(h, wkv_ref[...], preferred_element_type=jnp.float32)  # (tk,2H)
    k = kv[:, :H]
    v = kv[:, H:]
    # Full-width K RoPE (wk columns pre-permuted into per-head [re|im] layout).
    k = k * cosk_ref[...] + _rope_partner(k, n_heads, head_dim) * sink_ref[...]
    kt_ref[0] = k.T.astype(jnp.bfloat16)                      # (H, tk)
    v_ref[0] = v.astype(jnp.bfloat16)                         # (tk, H)


# ----------------------- fused attention + FFN kernel ----------------------- #
def attn_ffn_block_kernel(xq_ref, segq_ref, segk_ref, cosq_ref, sinq_ref,
                          kt_ref, v_ref, anorm_ref, fnorm_ref,
                          wq_ref, wo_ref, w13_ref, w2_ref,
                          o_ref, ctx_scr, *, n_heads, head_dim, eps):
    inter = w2_ref.shape[0]

    x_q = xq_ref[0]                                           # (tq, H) f32

    # ---- Q projection (1/sqrt(head_dim) pre-folded into wq) ----
    hq = _rmsnorm(x_q, anorm_ref[...], eps).astype(jnp.bfloat16)
    q = jnp.dot(hq, wq_ref[...], preferred_element_type=jnp.float32)   # (tq,H)
    # Full-width Q RoPE outside the head loop (lane-dense VPU work only).
    q = q * cosq_ref[...] + _rope_partner(q, n_heads, head_dim) * sinq_ref[...]
    qb = q.astype(jnp.bfloat16)

    # Block-diagonal additive bias rebuilt in-kernel (no (S,S) operand).
    bias = jnp.where(segq_ref[...] == segk_ref[...], 0.0, -1e9)        # (tq,S)

    # TODO(synk): at large n_heads (16 for real Pixtral) switch this static
    # loop to lax.fori_loop over a heads-major scratch layout to bound the
    # live ranges of the per-head (tq,S) score/prob temporaries.
    for h in range(n_heads):
        lo = h * head_dim
        hi = lo + head_dim
        s = jnp.dot(qb[:, lo:hi], kt_ref[0, lo:hi, :],
                    preferred_element_type=jnp.float32)                # (tq,S)
        s = s + bias
        s = s - jnp.max(s, axis=-1, keepdims=True)
        p = jnp.exp(s)
        # approx reciprocal runs on the EUP slot; fine at inference accuracy.
        p = p * pl.reciprocal(jnp.sum(p, axis=-1, keepdims=True), approx=True)
        ctx = jnp.dot(p.astype(jnp.bfloat16), v_ref[0, :, lo:hi],
                      preferred_element_type=jnp.float32)              # (tq,hd)
        ctx_scr[:, lo:hi] = ctx.astype(jnp.bfloat16)

    # One full-depth (K = H) Wo matmul instead of n_heads K=head_dim matmuls.
    attn = jnp.dot(ctx_scr[...], wo_ref[...],
                   preferred_element_type=jnp.float32)
    h1 = x_q + attn

    # ---- SwiGLU FFN (fused w1|w3) ----
    # TODO(synk): on v7x (64 MiB VMEM) chunk w13/w2 over the intermediate dim
    # (or store weights in fp8) so the fused block stays resident at
    # H=1024 / I=4096; unnecessary at these shapes.
    h2 = _rmsnorm(h1, fnorm_ref[...], eps).astype(jnp.bfloat16)
    ab = jnp.dot(h2, w13_ref[...], preferred_element_type=jnp.float32)  # (tq,2I)
    a, b = ab[:, :inter], ab[:, inter:]
    ff = jnp.dot((a * jax.nn.sigmoid(a) * b).astype(jnp.bfloat16), w2_ref[...],
                 preferred_element_type=jnp.float32)

    o_ref[0] = (h1 + ff).astype(o_ref.dtype)


# ------------------------ hardware-awareness helpers ------------------------ #
def _supports_single_buffering():
    """Probe once whether pipeline_mode=pl.Buffered(1) compiles on this JAX/TPU."""
    def _k(x_ref, o_ref):
        o_ref[...] = x_ref[...] * 2.0
    try:
        x = jnp.ones((8, 128), jnp.float32)
        fn = pl.pallas_call(
            _k,
            out_shape=jax.ShapeDtypeStruct((8, 128), jnp.float32),
            grid=(2,),
            in_specs=[pl.BlockSpec((8, 128), lambda i: (0, 0),
                                   pipeline_mode=pl.Buffered(1))],
            out_specs=pl.BlockSpec((8, 128), lambda i: (0, 0)))
        jax.block_until_ready(fn(x))
        return True
    except Exception:
        return False


def _vmem_limit_bytes():
    try:
        info = pltpu.get_tpu_info()
        cap = getattr(info, "vmem_capacity_bytes", None)
        if cap:
            return int(cap * 0.85)      # ~54 MiB on v7x, ~108 MiB on v5e/v6e
    except Exception:
        pass
    return None


def _target_tq():
    try:
        info = pltpu.get_tpu_info()
        ver = str(getattr(info, "chip_version", "") or
                  getattr(info, "version", "")).lower()
        if "v5" in ver:
            return 128                  # v5e MXU is 128-wide
    except Exception:
        pass
    return 256                          # v6e / v7x MXU is 256-wide


def _choose_tq(S, target):
    tq = min(target, S)
    if tq % 8 != 0:
        tq = S if S <= 8 else (tq // 8) * 8
    # keep >= 2 query tiles where possible (megacore parallelism on v7x)
    if S > 8 and pl.cdiv(S, tq) < 2:
        tq = max(8, (((S + 1) // 2 + 7) // 8) * 8)
    return tq


# ------------------------------ Pallas wrappers ------------------------------ #
def _maybe_buffered(shape, index_map, single_buffer):
    if single_buffer:
        return pl.BlockSpec(shape, index_map, pipeline_mode=pl.Buffered(1))
    return pl.BlockSpec(shape, index_map)


def _compiler_params(vmem_limit):
    kwargs = dict(dimension_semantics=("parallel", "parallel"))
    if vmem_limit:
        kwargs["vmem_limit_bytes"] = int(vmem_limit)
    return pltpu.CompilerParams(**kwargs)


def kv_project_pallas(x, cos_full, sin_full, layer, n_heads, tk,
                      single_buffer, vmem_limit):
    B, S, H = x.shape
    hd = H // n_heads
    kernel = functools.partial(kv_project_kernel, n_heads=n_heads,
                               head_dim=hd, eps=_EPS)
    in_specs = [
        pl.BlockSpec((1, tk, H), lambda b, st: (b, st, 0)),     # x (S tile)
        pl.BlockSpec((tk, H), lambda b, st: (st, 0)),           # cos (S tile)
        pl.BlockSpec((tk, H), lambda b, st: (st, 0)),           # sin (S tile)
        _maybe_buffered((1, H), lambda b, st: (0, 0), single_buffer),
        _maybe_buffered((H, 2 * H), lambda b, st: (0, 0), single_buffer),
    ]
    out_specs = [
        pl.BlockSpec((1, H, tk), lambda b, st: (b, 0, st)),     # K^T
        pl.BlockSpec((1, tk, H), lambda b, st: (b, st, 0)),     # V
    ]
    out_shape = [jax.ShapeDtypeStruct((B, H, S), jnp.bfloat16),
                 jax.ShapeDtypeStruct((B, S, H), jnp.bfloat16)]
    kt, v = pl.pallas_call(
        kernel,
        out_shape=out_shape,
        grid_spec=pltpu.PrefetchScalarGridSpec(
            num_scalar_prefetch=0, grid=(B, S // tk),
            in_specs=in_specs, out_specs=out_specs),
        compiler_params=_compiler_params(vmem_limit),
    )(x, cos_full, sin_full, layer["attn_norm"], layer["wkv"])
    return kt, v


def attn_ffn_block_pallas(x, kt, v, aux, layer, n_heads, tq,
                          single_buffer, vmem_limit):
    B, S, H = x.shape
    hd = H // n_heads
    inter = layer["w2"].shape[0]
    nq = S // tq
    sb_kv = single_buffer and B == 1
    kernel = functools.partial(attn_ffn_block_kernel, n_heads=n_heads,
                               head_dim=hd, eps=_EPS)
    in_specs = [
        pl.BlockSpec((1, tq, H), lambda b, qt: (b, qt, 0)),     # x (query tile)
        pl.BlockSpec((tq, 1), lambda b, qt: (qt, 0)),           # seg ids (Q)
        _maybe_buffered((1, S), lambda b, qt: (0, 0), single_buffer),
        pl.BlockSpec((tq, H), lambda b, qt: (qt, 0)),           # cos (Q tile)
        pl.BlockSpec((tq, H), lambda b, qt: (qt, 0)),           # sin (Q tile)
        _maybe_buffered((1, H, S), lambda b, qt: (b, 0, 0), sb_kv),   # K^T
        _maybe_buffered((1, S, H), lambda b, qt: (b, 0, 0), sb_kv),   # V
        _maybe_buffered((1, H), lambda b, qt: (0, 0), single_buffer),
        _maybe_buffered((1, H), lambda b, qt: (0, 0), single_buffer),
        _maybe_buffered((H, H), lambda b, qt: (0, 0), single_buffer),       # wq
        _maybe_buffered((H, H), lambda b, qt: (0, 0), single_buffer),       # wo
        _maybe_buffered((H, 2 * inter), lambda b, qt: (0, 0), single_buffer),
        _maybe_buffered((inter, H), lambda b, qt: (0, 0), single_buffer),
    ]
    return pl.pallas_call(
        kernel,
        out_shape=jax.ShapeDtypeStruct((B, S, H), x.dtype),
        grid_spec=pltpu.PrefetchScalarGridSpec(
            num_scalar_prefetch=0, grid=(B, nq),
            in_specs=in_specs,
            out_specs=pl.BlockSpec((1, tq, H), lambda b, qt: (b, qt, 0)),
            scratch_shapes=[pltpu.VMEM((tq, H), jnp.bfloat16)]),
        compiler_params=_compiler_params(vmem_limit),
    )(x, aux["seg_q"], aux["seg_k"], aux["cos"], aux["sin"],
      kt, v, layer["attn_norm"], layer["ffn_norm"],
      layer["wq"], layer["wo"], layer["w13"], layer["w2"])


def transformer_forward(x, seg, cos_half, sin_half, layers, n_heads):
    B, S, H = x.shape
    tq = _choose_tq(S, _target_tq())
    s_pad = pl.cdiv(S, tq) * tq
    tk = tq if tq % 128 == 0 else s_pad      # K/V pass sequence-tile size

    if s_pad != S:                            # pad instead of tq = S fallback
        pad = s_pad - S
        x = jnp.pad(x, ((0, 0), (0, pad), (0, 0)))
        seg = jnp.pad(seg, (0, pad), constant_values=-1)
        cos_half = jnp.pad(cos_half, ((0, pad), (0, 0)), constant_values=1.0)
        sin_half = jnp.pad(sin_half, ((0, pad), (0, 0)))

    # Full-width RoPE tables in the per-head [re | im] split layout.
    cos_full = jnp.tile(jnp.concatenate([cos_half, cos_half], axis=1),
                        (1, n_heads)).astype(jnp.float32)
    sin_full = jnp.tile(jnp.concatenate([-sin_half, sin_half], axis=1),
                        (1, n_heads)).astype(jnp.float32)
    aux = {
        "seg_q": seg.reshape(s_pad, 1).astype(jnp.int32),
        "seg_k": seg.reshape(1, s_pad).astype(jnp.int32),
        "cos": cos_full, "sin": sin_full,
    }

    single_buffer = _supports_single_buffering()
    vmem_limit = _vmem_limit_bytes()

    for layer in layers:
        kt, v = kv_project_pallas(x, cos_full, sin_full, layer, n_heads, tk,
                                  single_buffer, vmem_limit)
        x = attn_ffn_block_pallas(x, kt, v, aux, layer, n_heads, tq,
                                  single_buffer, vmem_limit)
    return x[:, :S, :]


# ---------------------------- parameter packing ----------------------------- #
def pack_layer_params(wq, wk, wv, wo, w1, w2, w3, attn_norm, ffn_norm, n_heads):
    H = wq.shape[0]
    hd = H // n_heads
    hd2 = hd // 2
    # interleaved (re, im) pairs -> per-head [re | im] split layout
    perm = []
    for h in range(n_heads):
        lo = h * hd
        perm += [lo + 2 * i for i in range(hd2)]
        perm += [lo + 2 * i + 1 for i in range(hd2)]
    perm = jnp.array(perm, jnp.int32)
    scale = 1.0 / math.sqrt(hd)          # fold attention scale into wq
    return dict(
        wq=(wq[:, perm] * scale).astype(jnp.bfloat16),
        wkv=jnp.concatenate([wk[:, perm], wv], axis=1).astype(jnp.bfloat16),
        wo=wo.astype(jnp.bfloat16),
        w13=jnp.concatenate([w1, w3], axis=1).astype(jnp.bfloat16),
        w2=w2.astype(jnp.bfloat16),
        attn_norm=attn_norm, ffn_norm=ffn_norm)


# -------------------- host-side preprocessing (plain JAX) ------------------- #
# TODO(synk): patch_conv / ln_pre are memory-light preprocessing left to XLA;
# only the transformer stack (the hot loop) runs in Pallas.
def _patchify(img, wp, patch):
    # patch_conv with kernel == stride == patch_size  ==  linear on patches
    C, Hpx, Wpx = img.shape
    nh, nw = Hpx // patch, Wpx // patch
    t = img.reshape(C, nh, patch, nw, patch)
    t = jnp.transpose(t, (1, 3, 0, 2, 4)).reshape(nh * nw, C * patch * patch)
    return t @ wp, (nh, nw)


def precompute_freqs_2d(dim, height, width, theta):
    freqs = 1.0 / theta ** (jnp.arange(0, dim, 2, dtype=jnp.float32) / dim)
    h = jnp.arange(height, dtype=jnp.float32)
    w = jnp.arange(width, dtype=jnp.float32)
    fh = jnp.outer(h, freqs[0::2])
    fw = jnp.outer(w, freqs[1::2])
    f2d = jnp.concatenate(
        [jnp.repeat(fh[:, None, :], width, axis=1),
         jnp.repeat(fw[None, :, :], height, axis=0)], axis=-1)
    return jnp.cos(f2d), jnp.sin(f2d)


# ----------------------- pure-JAX f32 reference (check) --------------------- #
def _ref_rope(x, cos_half, sin_half):
    xr, xi = x[..., 0::2], x[..., 1::2]
    c = cos_half[None, :, None, :]
    s = sin_half[None, :, None, :]
    out_r = xr * c - xi * s
    out_i = xr * s + xi * c
    return jnp.stack([out_r, out_i], axis=-1).reshape(x.shape)


def _ref_block(x, mask, cos_half, sin_half, layer, n_heads):
    B, S, H = x.shape
    hd = H // n_heads
    h = _rmsnorm(x, layer["attn_norm"])
    q = (h @ layer["wq"]).reshape(B, S, n_heads, hd)
    k = (h @ layer["wk"]).reshape(B, S, n_heads, hd)
    v = (h @ layer["wv"]).reshape(B, S, n_heads, hd)
    q = _ref_rope(q, cos_half, sin_half)
    k = _ref_rope(k, cos_half, sin_half)
    s = jnp.einsum("bqhd,bkhd->bhqk", q, k) / math.sqrt(hd)
    s = s + mask[None, None]
    p = jax.nn.softmax(s, axis=-1)
    o = jnp.einsum("bhqk,bkhd->bqhd", p, v).reshape(B, S, H)
    h1 = x + o @ layer["wo"]
    h2 = _rmsnorm(h1, layer["ffn_norm"])
    a = h2 @ layer["w1"]
    b = h2 @ layer["w3"]
    return h1 + (jax.nn.silu(a) * b) @ layer["w2"]


# ----------------------------------- main ----------------------------------- #
if __name__ == "__main__":
    # Small VisionEncoderArgs-consistent config.
    C, P, img_px = 4, 4, 16           # num_channels, patch_size, image_size
    H, I = 32, 64                     # hidden_size, intermediate_size
    n_heads, n_layers = 2, 2
    hd = H // n_heads                 # 16
    rope_theta = 10000.0

    key = jax.random.PRNGKey(0)
    key, k1, k2, kp = jax.random.split(key, 4)
    # Two images (C, 16, 16) -> 4x4 = 16 patches each -> S = 32 tokens.
    images = [jax.random.normal(k1, (C, img_px, img_px), jnp.float32),
              jax.random.normal(k2, (C, img_px, img_px), jnp.float32)]

    # patch_conv + ln_pre (host side) and position / segment bookkeeping
    wp = 0.1 * jax.random.normal(kp, (C * P * P, H), jnp.float32)
    ln_pre_w = jnp.ones((1, H), jnp.float32)
    embeds, poss, segs = [], [], []
    for idx, img in enumerate(images):
        e, (nh, nw) = _patchify(img, wp, P)
        embeds.append(e)
        yy, xx = jnp.meshgrid(jnp.arange(nh), jnp.arange(nw), indexing="ij")
        poss.append(jnp.stack([yy.reshape(-1), xx.reshape(-1)], axis=-1))
        segs.append(jnp.full((nh * nw,), idx, jnp.int32))
    x = _rmsnorm(jnp.concatenate(embeds, axis=0)[None], ln_pre_w)    # (1,S,H)
    positions = jnp.concatenate(poss, axis=0)
    seg = jnp.concatenate(segs, axis=0).astype(jnp.int32)
    B, S, _ = x.shape

    # 2-D rotary tables gathered at patch positions.
    max_side = img_px // P
    cos2d, sin2d = precompute_freqs_2d(hd, max_side, max_side, rope_theta)
    cos_half = cos2d[positions[:, 0], positions[:, 1]]              # (S, hd/2)
    sin_half = sin2d[positions[:, 0], positions[:, 1]]

    layers_ref, layers_krn = [], []
    for _ in range(n_layers):
        key, *ks = jax.random.split(key, 10)
        wq = 0.1 * jax.random.normal(ks[0], (H, H), jnp.float32)
        wk = 0.1 * jax.random.normal(ks[1], (H, H), jnp.float32)
        wv = 0.1 * jax.random.normal(ks[2], (H, H), jnp.float32)
        wo = 0.1 * jax.random.normal(ks[3], (H, H), jnp.float32)
        w1 = 0.1 * jax.random.normal(ks[4], (H, I), jnp.float32)
        w2 = 0.1 * jax.random.normal(ks[5], (I, H), jnp.float32)
        w3 = 0.1 * jax.random.normal(ks[6], (H, I), jnp.float32)
        an = 1.0 + 0.05 * jax.random.normal(ks[7], (1, H), jnp.float32)
        fn = 1.0 + 0.05 * jax.random.normal(ks[8], (1, H), jnp.float32)
        layers_ref.append(dict(wq=wq, wk=wk, wv=wv, wo=wo,
                               w1=w1, w2=w2, w3=w3,
                               attn_norm=an, ffn_norm=fn))
        layers_krn.append(pack_layer_params(wq, wk, wv, wo, w1, w2, w3,
                                            an, fn, n_heads))

    out = transformer_forward(x, seg, cos_half, sin_half, layers_krn, n_heads)
    out = jax.block_until_ready(out)
    out_tokens = out[0]                                   # squeeze(0) -> (S,H)

    # f32 reference mirroring the PyTorch module (unfused, interleaved RoPE).
    mask = jnp.where(seg[:, None] == seg[None, :], 0.0, -1e9).astype(jnp.float32)
    ref = x
    for layer in layers_ref:
        ref = _ref_block(ref, mask, cos_half, sin_half, layer, n_heads)
    ref = jax.block_until_ready(ref)[0]

    assert out_tokens.shape == (S, H) and out_tokens.dtype == jnp.float32
    if not jnp.allclose(out_tokens, ref, atol=5e-2, rtol=5e-2):
        err = float(jnp.max(jnp.abs(out_tokens - ref)))
        raise AssertionError(f"Pallas transformer mismatch, max abs err = {err}")

    print("KERNEL_OK")
</pallas_src>

<mosaic_0001>
module attributes {stable_mosaic.version = 11 : i64} {
  func.func @_k(%arg0: i32, %arg1: memref<8x128xf32, #tpu.memory_space<vmem>>, %arg2: memref<8x128xf32, #tpu.memory_space<vmem>>) attributes {dimension_semantics = [#tpu.dimension_semantics<arbitrary>], iteration_bounds = array<i64: 2>, scalar_prefetch = 0 : i64, scratch_operands = 0 : i64, tpu.core_type = #tpu.core_type<tc>, window_params = [{pipeline_mode = #tpu.pipeline_mode<synchronous>, transform_indices = @transform_0, window_bounds = array<i64: 8, 128>}, {pipeline_mode = #tpu.pipeline_mode<synchronous>, transform_indices = @transform_1, window_bounds = array<i64: 8, 128>}]} {
    %c0 = arith.constant 0 : index
    %c0_0 = arith.constant 0 : index
    %0 = vector.load %arg1[%c0, %c0_0] : memref<8x128xf32, #tpu.memory_space<vmem>>, vector<8x128xf32>
    %cst = arith.constant 2.000000e+00 : f32
    %1 = vector.broadcast %cst : f32 to vector<8x128xf32>
    %2 = arith.mulf %0, %1 : vector<8x128xf32>
    %c0_1 = arith.constant 0 : index
    %c0_2 = arith.constant 0 : index
    %3 = vector.load %arg2[%c0_1, %c0_2] : memref<8x128xf32, #tpu.memory_space<vmem>>, vector<8x128xf32>
    tpu.vector_store %arg2[%c0_1, %c0_2], %2 {strides = array<i32>} : memref<8x128xf32, #tpu.memory_space<vmem>>, vector<8x128xf32>,
    return
  }
  func.func @transform_0(%arg0: i32) -> (i32, i32) {
    %c0_i32 = arith.constant 0 : i32
    %c0_i32_0 = arith.constant 0 : i32
    %c0_i32_1 = arith.constant 0 : i32
    return %c0_i32, %c0_i32_0 : i32, i32
  }
  func.func @transform_1(%arg0: i32) -> (i32, i32) {
    %c0_i32 = arith.constant 0 : i32
    %c0_i32_0 = arith.constant 0 : i32
    %c0_i32_1 = arith.constant 0 : i32
    return %c0_i32, %c0_i32_0 : i32, i32
  }
}

module attributes {stable_mosaic.version = 11 : i64} {
  func.func @kv_project_kernel(%arg0: i32, %arg1: i32, %arg2: memref<1x32x32xf32, #tpu.memory_space<vmem>>, %arg3: memref<32x32xf32, #tpu.memory_space<vmem>>, %arg4: memref<32x32xf32, #tpu.memory_space<vmem>>, %arg5: memref<1x32xf32, #tpu.memory_space<vmem>>, %arg6: memref<32x64xbf16, #tpu.memory_space<vmem>>, %arg7: memref<1x32x32xbf16, #tpu.memory_space<vmem>>, %arg8: memref<1x32x32xbf16, #tpu.memory_space<vmem>>) attributes {dimension_semantics = [#tpu.dimension_semantics<parallel>, #tpu.dimension_semantics<parallel>], iteration_bounds = array<i64: 1, 1>, scalar_prefetch = 0 : i64, scratch_operands = 0 : i64, tpu.core_type = #tpu.core_type<tc>, window_params = [{transform_indices = @transform_0, window_bounds = array<i64: 1, 32, 32>}, {transform_indices = @transform_1, window_bounds = array<i64: 32, 32>}, {transform_indices = @transform_2, window_bounds = array<i64: 32, 32>}, {pipeline_mode = #tpu.pipeline_mode<synchronous>, transform_indices = @transform_3, window_bounds = array<i64: 1, 32>}, {pipeline_mode = #tpu.pipeline_mode<synchronous>, transform_indices = @transform_4, window_bounds = array<i64: 32, 64>}, {transform_indices = @transform_5, window_bounds = array<i64: 1, 32, 32>}, {transform_indices = @transform_6, window_bounds = array<i64: 1, 32, 32>}]} {
    %c0 = arith.constant 0 : index
    %c0_0 = arith.constant 0 : index
    %c0_1 = arith.constant 0 : index
    %0 = vector.load %arg2[%c0, %c0_0, %c0_1] : memref<1x32x32xf32, #tpu.memory_space<vmem>>, vector<1x32x32xf32>
    %1 = vector.shape_cast %0 : vector<1x32x32xf32> to vector<32x32xf32>
    %c0_2 = arith.constant 0 : index
    %c0_3 = arith.constant 0 : index
    %2 = vector.load %arg5[%c0_2, %c0_3] : memref<1x32xf32, #tpu.memory_space<vmem>>, vector<1x32xf32>
    %3 = arith.mulf %1, %1 : vector<32x32xf32>
    %cst = arith.constant dense<0.000000e+00> : vector<32xf32>
    %4 = vector.multi_reduction <add>, %3, %cst [1] : vector<32x32xf32> to vector<32xf32>
    %5 = vector.shape_cast %4 : vector<32xf32> to vector<32x1xf32>
    %cst_4 = arith.constant 3.200000e+01 : f32
    %6 = vector.broadcast %cst_4 : f32 to vector<32x1xf32>
    %7 = arith.divf %5, %6 : vector<32x1xf32>
    %cst_5 = arith.constant 9.99999974E-6 : f32
    %8 = vector.broadcast %cst_5 : f32 to vector<32x1xf32>
    %9 = arith.addf %7, %8 : vector<32x1xf32>
    %10 = math.rsqrt %9 : vector<32x1xf32>
    %11 = vector.broadcast %10 : vector<32x1xf32> to vector<32x32xf32>
    %12 = arith.mulf %1, %11 : vector<32x32xf32>
    %13 = vector.broadcast %2 : vector<1x32xf32> to vector<32x32xf32>
    %14 = arith.mulf %12, %13 : vector<32x32xf32>
    %15 = arith.truncf %14 : vector<32x32xf32> to vector<32x32xbf16>
    %c0_6 = arith.constant 0 : index
    %c0_7 = arith.constant 0 : index
    %16 = vector.load %arg6[%c0_6, %c0_7] : memref<32x64xbf16, #tpu.memory_space<vmem>>, vector<32x64xbf16>
    %cst_8 = arith.constant dense<0.000000e+00> : vector<32x64xf32>
    %17 = tpu.matmul %15, %16, %cst_8 {dimension_numbers = #tpu.dot_dimension_numbers<[1], [0], [0], [1], [0, 0, 1, 1], [], []>} : vector<32x32xbf16>, vector<32x64xbf16>, vector<32x64xf32> -> vector<32x64xf32>
    %18 = vector.extract_strided_slice %17 {offsets = [0, 0], sizes = [32, 32], strides = [1, 1]} : vector<32x64xf32> to vector<32x32xf32>
    %19 = vector.extract_strided_slice %17 {offsets = [0, 32], sizes = [32, 32], strides = [1, 1]} : vector<32x64xf32> to vector<32x32xf32>
    %c0_9 = arith.constant 0 : index
    %c0_10 = arith.constant 0 : index
    %20 = vector.load %arg3[%c0_9, %c0_10] : memref<32x32xf32, #tpu.memory_space<vmem>>, vector<32x32xf32>
    %21 = arith.mulf %18, %20 : vector<32x32xf32>
    %22 = vector.extract_strided_slice %18 {offsets = [0, 8], sizes = [32, 8], strides = [1, 1]} : vector<32x32xf32> to vector<32x8xf32>
    %23 = vector.extract_strided_slice %18 {offsets = [0, 0], sizes = [32, 8], strides = [1, 1]} : vector<32x32xf32> to vector<32x8xf32>
    %24 = vector.extract_strided_slice %18 {offsets = [0, 24], sizes = [32, 8], strides = [1, 1]} : vector<32x32xf32> to vector<32x8xf32>
    %25 = vector.extract_strided_slice %18 {offsets = [0, 16], sizes = [32, 8], strides = [1, 1]} : vector<32x32xf32> to vector<32x8xf32>
    %26 = tpu.concatenate %22, %23, %24, %25 in 1 : vector<32x8xf32>, vector<32x8xf32>, vector<32x8xf32>, vector<32x8xf32> -> vector<32x32xf32>
    %c0_11 = arith.constant 0 : index
    %c0_12 = arith.constant 0 : index
    %27 = vector.load %arg4[%c0_11, %c0_12] : memref<32x32xf32, #tpu.memory_space<vmem>>, vector<32x32xf32>
    %28 = arith.mulf %26, %27 : vector<32x32xf32>
    %29 = arith.addf %21, %28 : vector<32x32xf32>
    %30 = tpu.transpose %29, [1, 0] : vector<32x32xf32> -> vector<32x32xf32>
    %31 = arith.truncf %30 : vector<32x32xf32> to vector<32x32xbf16>
    %c0_13 = arith.constant 0 : index
    %c0_14 = arith.constant 0 : index
    %c0_15 = arith.constant 0 : index
    %32 = vector.load %arg7[%c0_13, %c0_14, %c0_15] : memref<1x32x32xbf16, #tpu.memory_space<vmem>>, vector<1x32x32xbf16>
    %33 = vector.shape_cast %32 : vector<1x32x32xbf16> to vector<32x32xbf16>
    %34 = vector.shape_cast %31 : vector<32x32xbf16> to vector<1x32x32xbf16>
    tpu.vector_store %arg7[%c0_13, %c0_14, %c0_15], %34 {strides = array<i32>} : memref<1x32x32xbf16, #tpu.memory_space<vmem>>, vector<1x32x32xbf16>,
    %35 = arith.truncf %19 : vector<32x32xf32> to vector<32x32xbf16>
    %c0_16 = arith.constant 0 : index
    %c0_17 = arith.constant 0 : index
    %c0_18 = arith.constant 0 : index
    %36 = vector.load %arg8[%c0_16, %c0_17, %c0_18] : memref<1x32x32xbf16, #tpu.memory_space<vmem>>, vector<1x32x32xbf16>
    %37 = vector.shape_cast %36 : vector<1x32x32xbf16> to vector<32x32xbf16>
    %38 = vector.shape_cast %35 : vector<32x32xbf16> to vector<1x32x32xbf16>
    tpu.vector_store %arg8[%c0_16, %c0_17, %c0_18], %38 {strides = array<i32>} : memref<1x32x32xbf16, #tpu.memory_space<vmem>>, vector<1x32x32xbf16>,
    return
  }
  func.func @transform_0(%arg0: i32, %arg1: i32) -> (i32, i32, i32) {
    %c0_i32 = arith.constant 0 : i32
    %c0_i32_0 = arith.constant 0 : i32
    return %arg0, %arg1, %c0_i32 : i32, i32, i32
  }
  func.func @transform_1(%arg0: i32, %arg1: i32) -> (i32, i32) {
    %c0_i32 = arith.constant 0 : i32
    %c0_i32_0 = arith.constant 0 : i32
    return %arg1, %c0_i32 : i32, i32
  }
  func.func @transform_2(%arg0: i32, %arg1: i32) -> (i32, i32) {
    %c0_i32 = arith.constant 0 : i32
    %c0_i32_0 = arith.constant 0 : i32
    return %arg1, %c0_i32 : i32, i32
  }
  func.func @transform_3(%arg0: i32, %arg1: i32) -> (i32, i32) {
    %c0_i32 = arith.constant 0 : i32
    %c0_i32_0 = arith.constant 0 : i32
    %c0_i32_1 = arith.constant 0 : i32
    return %c0_i32, %c0_i32_0 : i32, i32
  }
  func.func @transform_4(%arg0: i32, %arg1: i32) -> (i32, i32) {
    %c0_i32 = arith.constant 0 : i32
    %c0_i32_0 = arith.constant 0 : i32
    %c0_i32_1 = arith.constant 0 : i32
    return %c0_i32, %c0_i32_0 : i32, i32
  }
  func.func @transform_5(%arg0: i32, %arg1: i32) -> (i32, i32, i32) {
    %c0_i32 = arith.constant 0 : i32
    %c0_i32_0 = arith.constant 0 : i32
    return %arg0, %c0_i32, %arg1 : i32, i32, i32
  }
  func.func @transform_6(%arg0: i32, %arg1: i32) -> (i32, i32, i32) {
    %c0_i32 = arith.constant 0 : i32
    %c0_i32_0 = arith.constant 0 : i32
    return %arg0, %arg1, %c0_i32 : i32, i32, i32
  }
}

</mosaic_0001>

<llo_original>
// kernel: tpu_custom_call.1
$region0: #{tpu_custom_call.1}
  #allocation0 [shape = 'u32[]', space=smem, size = 0x4, offset = 0x4, fixed_abs, tag = 'smem constant byte address 0x4 - core index']
  #allocation1 [shape = 'u32[144,128]{1,0:T(1,128)}', space=vmem, size = 0x12000, scoped, tag = 'internal scratch']
  %s0 = inlined_call_operand.hbm [shape: f32[8,128], index: 0, kind: input, shape index: {}]
  %s1 = inlined_call_operand.hbm [shape: f32[8,128], index: 1, kind: output, shape index: {}]
  %s2 = sld [smem:[#allocation0]]
  $region41: #{tpu_custom_call.1} parent=0
    _
  %s4 = ssub.s32 1, %s2
  %s5 = scalar_select 0, %s4, %s2
  $region1: #{tpu_custom_call.1} parent=0
    #allocation2 [shape = 'u8[4096]{0}', space=vmem, size = 0x1000, scoped, tag = 'input window, operand 0, single buffered']
    #allocation3 [shape = 's32[2]{0}', space=sflag, size = 0x8, scoped, tag = 'scoped memory for tpu_custom_call.1']
    #allocation4 [shape = 's32[2]{0}', space=sflag, size = 0x8, scoped, tag = 'scoped memory for tpu_custom_call.1']
    #allocation5 [shape = 'u8[4096]{0}', space=vmem, size = 0x1000, scoped, tag = 'output window, operand 0, single buffered']
    %6 = vsyncpa [#allocation3], 0
    %7 = vsyncpa [#allocation4], 0
    loop: start=0, step=1, limit=4
    $region2: #{tpu_custom_call.1} parent=1 // loop_pre_header
      _
    $region3: #{tpu_custom_call.1} parent=1 // loop_header
      %s9 = sphi 0, %s13
      %p10 = scmp.ge.s32.totalorder %s9, 4
      %s17 = sphi 0, %s17
      %s19 = sphi 0, %s17
      %s20 = sphi 0, %s19
      %s34 = sphi 0, %s20
      %s38 = sphi 0, %s38
      %s40 = sphi 0, %s38
      %s41 = sphi 0, %s40
      %s55 = sphi 0, %s41
    $region4: #{tpu_custom_call.1} parent=1 // loop_header_branch
      %12 = sbr.rel (%p10) target = $region8
    $region5: #{tpu_custom_call.1} parent=1 // loop_body
      %s14 = ssub.s32 %s9, 1
      %s15 = ssub.s32 %s9, 2
      %s16 = sadd.s32 %s9, 1
      %s18 = sadd.s32 %s17, 1
      %p21 = scmp.eq.s32.totalorder %s9, 1
      %p22 = scmp.ne.s32.totalorder %s17, %s19
      %p23 = scmp.eq.s32.totalorder %s9, 0
      %p24 = por %p22, %p23
      %p25 = scmp.ne.s32.totalorder %s17, %s19
      %p26 = scmp.eq.s32.totalorder %s14, 1
      %p27 = por %p25, %p26
      %p28 = scmp.ne.s32.totalorder %s19, %s20
      %p29 = scmp.eq.s32.totalorder %s14, 0
      %p30 = por %p28, %p29
      %p31 = scmp.ne.s32.totalorder %s19, %s20
      %p32 = scmp.eq.s32.totalorder %s15, 1
      %p33 = por %p31, %p32
      %p35 = scmp.ne.s32.totalorder %s20, %s34
      %p36 = scmp.eq.s32.totalorder %s15, 0
      %p37 = por %p35, %p36
      %s39 = sadd.s32 %s38, 1
      %p42 = scmp.eq.s32.totalorder %s9, 1
      %p43 = scmp.ne.s32.totalorder %s38, %s40
      %p44 = scmp.eq.s32.totalorder %s9, 0
      %p45 = por %p43, %p44
      %p46 = scmp.ne.s32.totalorder %s38, %s40
      %p47 = scmp.eq.s32.totalorder %s14, 1
      %p48 = por %p46, %p47
      %p49 = scmp.ne.s32.totalorder %s40, %s41
      %p50 = scmp.eq.s32.totalorder %s14, 0
      %p51 = por %p49, %p50
      %p52 = scmp.ne.s32.totalorder %s40, %s41
      %p53 = scmp.eq.s32.totalorder %s15, 1
      %p54 = por %p52, %p53
      %p56 = scmp.ne.s32.totalorder %s41, %s55
      %p57 = scmp.eq.s32.totalorder %s15, 0
      %p58 = por %p56, %p57
      %p59 = scmp.le.s32.totalorder 1, %s9
      %p60 = scmp.lt.s32.totalorder %s9, 3
      %p61 = pnand %p59, %p60
      %p62 = pneg %p61
      // Predicated region
      $region9: #{tpu_custom_call.1} parent=5 // pred_check
        _
      $region10: #{tpu_custom_call.1} parent=5 // pred_check_branch
        %64 = sbr.rel (%p61) target = $region12
      $region11: #{tpu_custom_call.1} parent=5 // pred_region
        %s65 = ssub.s32 %s9, 1
        // Predicated region
        $region13: #{tpu_custom_call.1} parent=11 // pred_check
          %p66 = pneg %p30
        $region14: #{tpu_custom_call.1} parent=11 // pred_check_branch
          %68 = sbr.rel (%p66) target = $region16
        $region15: #{tpu_custom_call.1} parent=11 // pred_region
          %s70 = ssub.s32 128, 128
          %71 = vsyncadd [#allocation3], %s70
          %s73 = sshll.u32 [#allocation2], 4
          %s74 = int_to_ptr.vmem [resolvable:$true] %s73
          %76 = dma.hbm_to_vmem [thread:$0]  %s0, 128, %s74, [#allocation3]
        $region16: #{tpu_custom_call.1} parent=11 // pred_fallthru
          _
      $region12: #{tpu_custom_call.1} parent=5 // pred_fallthru
        _
      %p77 = scmp.lt.s32.totalorder %s9, 2
      // Predicated region
      $region17: #{tpu_custom_call.1} parent=5 // pred_check
        %p78 = pneg %p77
      $region18: #{tpu_custom_call.1} parent=5 // pred_check_branch
        %80 = sbr.rel (%p78) target = $region20
      $region19: #{tpu_custom_call.1} parent=5 // pred_region
        _
      $region20: #{tpu_custom_call.1} parent=5 // pred_fallthru
        _
      %p81 = scmp.le.s32.totalorder 1, %s9
      %p82 = scmp.lt.s32.totalorder %s9, 3
      %p83 = pnand %p81, %p82
      %p84 = pneg %p83
      // Predicated region
      $region21: #{tpu_custom_call.1} parent=5 // pred_check
        _
      $region22: #{tpu_custom_call.1} parent=5 // pred_check_branch
        %86 = sbr.rel (%p83) target = $region24
      $region23: #{tpu_custom_call.1} parent=5 // pred_region
        %s87 = ssub.s32 %s9, 1
        // Predicated region
        $region25: #{tpu_custom_call.1} parent=23 // pred_check
          %p88 = pneg %p30
        $region26: #{tpu_custom_call.1} parent=23 // pred_check_branch
          %90 = sbr.rel (%p88) target = $region28
        $region27: #{tpu_custom_call.1} parent=23 // pred_region
          %91 = dma.done [#allocation3], 128
        $region28: #{tpu_custom_call.1} parent=23 // pred_fallthru
          _
        %p92 = pneg %p30
        %p93 = pneg %p27
        %p94 = pneg %p51
        %p95 = pneg %p48
        %v96 = vld [vmem:[#allocation2] sm:$0xff]
        %v97 = vmul.f32 %v96, 2.0
        %98 = vst [vmem:[#allocation5] sm:$0xff] %v97
        // Predicated region
        $region29: #{tpu_custom_call.1} parent=23 // pred_check
          %p99 = pneg %p48
        $region30: #{tpu_custom_call.1} parent=23 // pred_check_branch
          %101 = sbr.rel (%p99) target = $region32
        $region31: #{tpu_custom_call.1} parent=23 // pred_region
          %s103 = ssub.s32 128, 128
          %104 = vsyncadd [#allocation4], %s103
          %s106 = sshll.u32 [#allocation5], 4
          %s107 = int_to_ptr.vmem [resolvable:$true] %s106
          %109 = dma.vmem_to_hbm [thread:$0]  %s107, 128, %s1, [#allocation4]
        $region32: #{tpu_custom_call.1} parent=23 // pred_fallthru
          _
        // Predicated region
        $region33: #{tpu_custom_call.1} parent=23 // pred_check
          %p110 = pneg %p48
        $region34: #{tpu_custom_call.1} parent=23 // pred_check_branch
          %112 = sbr.rel (%p110) target = $region36
        $region35: #{tpu_custom_call.1} parent=23 // pred_region
          %113 = dma.done [#allocation4], 128
        $region36: #{tpu_custom_call.1} parent=23 // pred_fallthru
          _
      $region24: #{tpu_custom_call.1} parent=5 // pred_fallthru
        _
      %p114 = scmp.le.s32.totalorder 2, %s9
      // Predicated region
      $region37: #{tpu_custom_call.1} parent=5 // pred_check
        %p115 = pneg %p114
      $region38: #{tpu_custom_call.1} parent=5 // pred_check_branch
        %117 = sbr.rel (%p115) target = $region40
      $region39: #{tpu_custom_call.1} parent=5 // pred_region
        %s118 = ssub.s32 %s9, 2
      $region40: #{tpu_custom_call.1} parent=5 // pred_fallthru
        _
    $region6: #{tpu_custom_call.1} parent=1 // loop_footer
      %s13 = sadd.s32 1, %s9
    $region7: #{tpu_custom_call.1} parent=1 // loop_footer_branch
      %8 = sbr.rel target = $region3
    $region8: #{tpu_custom_call.1} parent=1 // loop_exit
      _
    %119 = vsyncpa [#allocation3], 1
    %s120 = scalar_lea.sflag [#allocation3], 1
    %121 = vsyncpa %s120, 1
    %122 = vsyncpa [#allocation4], 1
    %s123 = scalar_lea.sflag [#allocation4], 1
    %124 = vsyncpa %s123, 1

// kernel: tpu_custom_call.1
$region0: #{tpu_custom_call.1}
  #allocation0 [shape = 'u32[]', space=smem, size = 0x4, offset = 0x4, fixed_abs, tag = 'smem constant byte address 0x4 - core index']
  #allocation1 [shape = 'u32[144,128]{1,0:T(1,128)}', space=vmem, size = 0x12000, scoped, tag = 'internal scratch']
  %s0 = inlined_call_operand.hbm [shape: f32[1,32,32], index: 0, kind: input, shape index: {}]
  %s1 = inlined_call_operand.hbm [shape: f32[32,32], index: 1, kind: input, shape index: {}]
  %s2 = inlined_call_operand.hbm [shape: f32[32,32], index: 2, kind: input, shape index: {}]
  %s3 = inlined_call_operand.vmem [shape: f32[1,32], index: 3, kind: input, shape index: {}]
  %s4 = inlined_call_operand.hbm [shape: bf16[32,64], index: 4, kind: input, shape index: {}]
  %s5 = inlined_call_operand.hbm [shape: bf16[1,32,32], index: 5, kind: output, shape index: {0}]
  %s6 = inlined_call_operand.hbm [shape: bf16[1,32,32], index: 6, kind: output, shape index: {1}]
  %7 = xla_tuple %s5, %s6
  %s8 = sld [smem:[#allocation0]]
  $region54: #{tpu_custom_call.1} parent=0
    _
  %s10 = ssub.s32 1, %s8
  %s11 = scalar_select 0, %s10, %s8
  $region1: #{tpu_custom_call.1} parent=0
    #allocation2 [shape = 'u8[16384]{0}', space=vmem, size = 0x4000, scoped, tag = 'input window, operand 0, single buffered']
    #allocation3 [shape = 's32[1]{0}', space=sflag, size = 0x4, scoped, tag = 'scoped memory for tpu_custom_call.1']
    #allocation4 [shape = 's32[1]{0}', space=sflag, size = 0x4, scoped, tag = 'scoped memory for tpu_custom_call.1']
    #allocation5 [shape = 'u8[16384]{0}', space=vmem, size = 0x4000, scoped, tag = 'input window, operand 1, single buffered']
    #allocation6 [shape = 's32[1]{0}', space=sflag, size = 0x4, scoped, tag = 'scoped memory for tpu_custom_call.1']
    #allocation7 [shape = 'u8[16384]{0}', space=vmem, size = 0x4000, scoped, tag = 'input window, operand 2, single buffered']
    #allocation8 [shape = 'u8[8192]{0}', space=vmem, size = 0x2000, scoped, tag = 'input window, operand 4, single buffered']
    #allocation9 [shape = 's32[1]{0}', space=sflag, size = 0x4, scoped, tag = 'scoped memory for tpu_custom_call.1']
    #allocation10 [shape = 'u8[8192]{0}', space=vmem, size = 0x2000, scoped, tag = 'output window, operand 0, single buffered']
    #allocation11 [shape = 'u8[8192]{0}', space=vmem, size = 0x2000, scoped, tag = 'output window, operand 1, single buffered']
    #allocation12 [shape = 's32[1]{0}', space=sflag, size = 0x4, scoped, tag = 'scoped memory for tpu_custom_call.1']
    %12 = vsyncpa [#allocation3], 0
    %13 = vsyncpa [#allocation6], 0
    %14 = vsyncpa [#allocation9], 0
    %15 = vsyncpa [#allocation4], 0
    %16 = vsyncpa [#allocation12], 0
    // Predicated region
    $region2: #{tpu_custom_call.1} parent=1 // pred_check
      _
    $region3: #{tpu_custom_call.1} parent=1 // pred_check_branch
      %18 = sbr.rel (0) target = $region5
    $region4: #{tpu_custom_call.1} parent=1 // pred_region
      %s20 = ssub.s32 512, 512
      %21 = vsyncadd [#allocation3], %s20
      %s22 = sshll.u32 [#allocation2], 4
      %s23 = int_to_ptr.vmem [resolvable:$true] %s22
      %28 = dma.hbm_to_vmem [thread:$0]  %s0, 512, %s23, [#allocation3], 128, 128, 8
    $region5: #{tpu_custom_call.1} parent=1 // pred_fallthru
      _
    // Predicated region
    $region6: #{tpu_custom_call.1} parent=1 // pred_check
      _
    $region7: #{tpu_custom_call.1} parent=1 // pred_check_branch
      %30 = sbr.rel (0) target = $region9
    $region8: #{tpu_custom_call.1} parent=1 // pred_region
      %s32 = ssub.s32 512, 512
      %33 = vsyncadd [#allocation6], %s32
      %s34 = sshll.u32 [#allocation5], 4
      %s35 = int_to_ptr.vmem [resolvable:$true] %s34
      %40 = dma.hbm_to_vmem [thread:$0]  %s1, 512, %s35, [#allocation6], 128, 128, 8
    $region9: #{tpu_custom_call.1} parent=1 // pred_fallthru
      _
    // Predicated region
    $region10: #{tpu_custom_call.1} parent=1 // pred_check
      _
    $region11: #{tpu_custom_call.1} parent=1 // pred_check_branch
      %42 = sbr.rel (0) target = $region13
    $region12: #{tpu_custom_call.1} parent=1 // pred_region
      %s44 = ssub.s32 512, 512
      %45 = vsyncadd [#allocation6], %s44
      %s46 = sshll.u32 [#allocation7], 4
      %s47 = int_to_ptr.vmem [resolvable:$true] %s46
      %52 = dma.hbm_to_vmem [thread:$0]  %s2, 512, %s47, [#allocation6], 128, 128, 8
    $region13: #{tpu_custom_call.1} parent=1 // pred_fallthru
      _
    // Predicated region
    $region14: #{tpu_custom_call.1} parent=1 // pred_check
      _
    $region15: #{tpu_custom_call.1} parent=1 // pred_check_branch
      %54 = sbr.rel (0) target = $region17
    $region16: #{tpu_custom_call.1} parent=1 // pred_region
      _
    $region17: #{tpu_custom_call.1} parent=1 // pred_fallthru
      _
    // Predicated region
    $region18: #{tpu_custom_call.1} parent=1 // pred_check
      _
    $region19: #{tpu_custom_call.1} parent=1 // pred_check_branch
      %56 = sbr.rel (0) target = $region21
    $region20: #{tpu_custom_call.1} parent=1 // pred_region
      %s58 = ssub.s32 256, 256
      %59 = vsyncadd [#allocation9], %s58
      %s60 = sshll.u32 [#allocation8], 4
      %s61 = int_to_ptr.vmem [resolvable:$true] %s60
      %66 = dma.hbm_to_vmem [thread:$0]  %s4, 256, %s61, [#allocation9], 64, 64, 4
    $region21: #{tpu_custom_call.1} parent=1 // pred_fallthru
      _
    // Predicated region
    $region22: #{tpu_custom_call.1} parent=1 // pred_check
      _
    $region23: #{tpu_custom_call.1} parent=1 // pred_check_branch
      %68 = sbr.rel (0) target = $region25
    $region24: #{tpu_custom_call.1} parent=1 // pred_region
      %69 = dma.done [#allocation3], 512
    $region25: #{tpu_custom_call.1} parent=1 // pred_fallthru
      _
    // Predicated region
    $region26: #{tpu_custom_call.1} parent=1 // pred_check
      _
    $region27: #{tpu_custom_call.1} parent=1 // pred_check_branch
      %71 = sbr.rel (0) target = $region29
    $region28: #{tpu_custom_call.1} parent=1 // pred_region
      %72 = dma.done [#allocation6], 512
    $region29: #{tpu_custom_call.1} parent=1 // pred_fallthru
      _
    // Predicated region
    $region30: #{tpu_custom_call.1} parent=1 // pred_check
      _
    $region31: #{tpu_custom_call.1} parent=1 // pred_check_branch
      %74 = sbr.rel (0) target = $region33
    $region32: #{tpu_custom_call.1} parent=1 // pred_region
      %75 = dma.done [#allocation6], 512
    $region33: #{tpu_custom_call.1} parent=1 // pred_fallthru
      _
    // Predicated region
    $region34: #{tpu_custom_call.1} parent=1 // pred_check
      _
    $region35: #{tpu_custom_call.1} parent=1 // pred_check_branch
      %77 = sbr.rel (0) target = $region37
    $region36: #{tpu_custom_call.1} parent=1 // pred_region
      %78 = dma.done [#allocation9], 256
    $region37: #{tpu_custom_call.1} parent=1 // pred_fallthru
      _
    %v80 = vld [vmem:[#allocation2] sm:$0xff]
    %v81 = vld [vmem:[#allocation2 + $0x8] sm:$0xff]
    %v82 = vld [vmem:[#allocation2 + $0x10] sm:$0xff]
    %v83 = vld [vmem:[#allocation2 + $0x18] sm:$0xff]
    %v84 = vld [vmem:[%s3] sm:$0x1]
    %v85 = vmul.f32 %v80, %v80
    %v86 = vmul.f32 %v81, %v81
    %v87 = vmul.f32 %v82, %v82
    %v88 = vmul.f32 %v83, %v83
    %vm89 = vcmask 261120
    %v90 = vsel %vm89, %v85, 0.0
    %91 = vadd.xlane.f32.xlu0 %v90
    %v92 = vpop.xlane.xlu0 %91
    %v93 = vsel %vm89, %v86, 0.0
    %94 = vadd.xlane.f32.xlu0 %v93
    %v95 = vpop.xlane.xlu0 %94
    %v96 = vsel %vm89, %v87, 0.0
    %97 = vadd.xlane.f32.xlu0 %v96
    %v98 = vpop.xlane.xlu0 %97
    %v99 = vsel %vm89, %v88, 0.0
    %100 = vadd.xlane.f32.xlu0 %v99
    %v101 = vpop.xlane.xlu0 %100
    %v102 = vrcp.pop 32.0
    %v103 = vmul.f32 %v92, %v102
    %v104 = vmul.f32 %v95, %v102
    %v105 = vmul.f32 %v98, %v102
    %v106 = vmul.f32 %v101, %v102
    %v107 = vadd.f32 %v103, 1e-05
    %v108 = vadd.f32 %v104, 1e-05
    %v109 = vadd.f32 %v105, 1e-05
    %v110 = vadd.f32 %v106, 1e-05
    %v111 = vrsqrt.pop %v107
    %v112 = vrsqrt.pop %v108
    %v113 = vrsqrt.pop %v109
    %v114 = vrsqrt.pop %v110
    %v115 = vmul.f32 %v80, %v111
    %v116 = vmul.f32 %v81, %v112
    %v117 = vmul.f32 %v82, %v113
    %v118 = vmul.f32 %v83, %v114
    %v120 = vlaneseq
    %v121 = vshrl.u32 %v120, 7
    %v122 = vsub.s32 0, %v121
    %v123 = vrot.slane %v84, %v122
    %v125 = vmul.f32 %v115, %v123
    %v126 = vmul.f32 %v116, %v123
    %v127 = vmul.f32 %v117, %v123
    %v128 = vmul.f32 %v118, %v123
    %v129 = vpack.c.bf16 %v126, %v125
    %v130 = vpack.c.bf16 %v128, %v127
    %v131 = vld [vmem:[#allocation8] sm:$0xf]
    %v132 = vld [vmem:[#allocation8 + $0x4] sm:$0xf]
    %v133 = vld [vmem:[#allocation8 + $0x8] sm:$0xf]
    %v134 = vld [vmem:[#allocation8 + $0xc] sm:$0xf]
    %v139 = vunpack.c.l.b16 %v131
    %v140 = vunpack.c.l.b16 %v132
    %v141 = vunpack.c.l.b16 %v133
    %v142 = vunpack.c.l.b16 %v134
    %v143 = vpack.c.b16 %v140, %v139
    %v144 = vpack.c.b16 %v142, %v141
    %v148 = vsel %vm89, %v129, 0
    %v151 = vsel %vm89, %v130, 0
    %153 = vmatprep.subr.bf16.mxu0 0
    %154 = vmatpush1.bf16.msra.mxu0 %v143
    %155 = vmatprep.subr.bf16.mxu0 0
    %156 = vmatpush1.bf16.msra.mxu0 %v144
    %157 = vmatprep.subr.bf16.mxu0 0
    %158 = vmatpush1.bf16.msra.mxu0 0
    %159 = vmatprep.subr.bf16.mxu0 0
    %160 = vmatpush1.bf16.msra.mxu0 0
    %161 = vmatprep.subr.bf16.mxu0 0
    %162 = vmatpush1.bf16.msra.mxu0 0
    %163 = vmatprep.subr.bf16.mxu0 0
    %164 = vmatpush1.bf16.msra.mxu0 0
    %165 = vmatprep.subr.bf16.mxu0 0
    %166 = vmatpush1.bf16.msra.mxu0 0
    %167 = vmatprep.subr.bf16.mxu0 0
    %168 = vmatpush1.bf16.msra.mxu0 0
    %169 = vmatprep.subr.bf16.mxu0 0
    %170 = vmatpush1.bf16.msra.mxu0 0
    %171 = vmatprep.subr.bf16.mxu0 0
    %172 = vmatpush1.bf16.msra.mxu0 0
    %173 = vmatprep.subr.bf16.mxu0 0
    %174 = vmatpush1.bf16.msra.mxu0 0
    %175 = vmatprep.subr.bf16.mxu0 0
    %176 = vmatpush1.bf16.msra.mxu0 0
    %177 = vmatprep.subr.bf16.mxu0 0
    %178 = vmatpush1.bf16.msra.mxu0 0
    %179 = vmatprep.subr.bf16.mxu0 0
    %180 = vmatpush1.bf16.msra.mxu0 0
    %181 = vmatprep.subr.bf16.mxu0 0
    %182 = vmatpush1.bf16.msra.mxu0 0
    %183 = vmatprep.subr.bf16.mxu0 0
    %184 = vmatpush1.bf16.msra.mxu0 0
    %185 = vmatprep.mubr.bf16.mxu0 0
    %186 = vmatmul.mubr.bf16.gmra.mrb[0].mxu0 %v148
    %v187 = vpop.f32.mrb[0].mxu0
    %v188 = vadd.f32 0.0, %v187
    %v189 = vpop.f32.mrb[0].mxu0
    %v190 = vpop.f32.mrb[0].mxu0
    %v191 = vadd.f32 0.0, %v190
    %v192 = vpop.f32.mrb[0].mxu0
    %193 = vmatprep.mubr.bf16.mxu0 0
    %194 = vmatmul.mubr.bf16.gmra.mrb[0].mxu0 %v151
    %v195 = vpop.f32.mrb[0].mxu0
    %v196 = vadd.f32 0.0, %v195
    %v197 = vpop.f32.mrb[0].mxu0
    %v198 = vpop.f32.mrb[0].mxu0
    %v199 = vadd.f32 0.0, %v198
    %v200 = vpop.f32.mrb[0].mxu0
    %201 = vdwg.mxu0
    %v202 = vld [vmem:[#allocation5] sm:$0xff]
    %v203 = vld [vmem:[#allocation5 + $0x8] sm:$0xff]
    %v204 = vld [vmem:[#allocation5 + $0x10] sm:$0xff]
    %v205 = vld [vmem:[#allocation5 + $0x18] sm:$0xff]
    %v206 = vmul.f32 %v188, %v202
    %v207 = vmul.f32 %v191, %v203
    %v208 = vmul.f32 %v196, %v204
    %v209 = vmul.f32 %v199, %v205
    %214 = vrot.lane.b32.xlu0 %v188, 120
    %v215 = vpop.permute.xlu0 %214
    %216 = vrot.lane.b32.xlu0 %v191, 120
    %v217 = vpop.permute.xlu0 %216
    %218 = vrot.lane.b32.xlu0 %v196, 120
    %v219 = vpop.permute.xlu0 %218
    %220 = vrot.lane.b32.xlu0 %v199, 120
    %v221 = vpop.permute.xlu0 %220
    %226 = vrot.lane.b32.xlu0 %v188, 8
    %v227 = vpop.permute.xlu0 %226
    %228 = vrot.lane.b32.xlu0 %v191, 8
    %v229 = vpop.permute.xlu0 %228
    %230 = vrot.lane.b32.xlu0 %v196, 8
    %v231 = vpop.permute.xlu0 %230
    %232 = vrot.lane.b32.xlu0 %v199, 8
    %v233 = vpop.permute.xlu0 %232
    %vm238 = vcmask 64512
    %v239 = vsel %vm238, %v215, %v227
    %v240 = vsel %vm238, %v217, %v229
    %v241 = vsel %vm238, %v219, %v231
    %v242 = vsel %vm238, %v221, %v233
    %vm243 = vcmask 130048
    %v244 = vsel %vm243, %v239, %v215
    %v245 = vsel %vm243, %v240, %v217
    %v246 = vsel %vm243, %v241, %v219
    %v247 = vsel %vm243, %v242, %v221
    %vm248 = vcmask 195584
    %v249 = vsel %vm248, %v244, %v227
    %v250 = vsel %vm248, %v245, %v229
    %v251 = vsel %vm248, %v246, %v231
    %v252 = vsel %vm248, %v247, %v233
    %v253 = vld [vmem:[#allocation7] sm:$0xff]
    %v254 = vld [vmem:[#allocation7 + $0x8] sm:$0xff]
    %v255 = vld [vmem:[#allocation7 + $0x10] sm:$0xff]
    %v256 = vld [vmem:[#allocation7 + $0x18] sm:$0xff]
    %v257 = vmul.f32 %v249, %v253
    %v258 = vmul.f32 %v250, %v254
    %v259 = vmul.f32 %v251, %v255
    %v260 = vmul.f32 %v252, %v256
    %v261 = vadd.f32 %v206, %v257
    %v262 = vadd.f32 %v207, %v258
    %v263 = vadd.f32 %v208, %v259
    %v264 = vadd.f32 %v209, %v260
    %265 = vxpose.xlu0.b32.start [1/16] %v261, 128
    %266 = vxpose.xlu0.b32.cont [2/16] %v262, 128
    %267 = vxpose.xlu0.b32.cont [3/16] %v263, 128
    %268 = vxpose.xlu0.b32.cont [4/16] %v264, 128
    %269 = vxpose.xlu0.b32.cont [5/16] 0.0, 128
    %270 = vxpose.xlu0.b32.cont [6/16] 0.0, 128
    %271 = vxpose.xlu0.b32.cont [7/16] 0.0, 128
    %272 = vxpose.xlu0.b32.cont [8/16] 0.0, 128
    %273 = vxpose.xlu0.b32.cont [9/16] 0.0, 128
    %274 = vxpose.xlu0.b32.cont [10/16] 0.0, 128
    %275 = vxpose.xlu0.b32.cont [11/16] 0.0, 128
    %276 = vxpose.xlu0.b32.cont [12/16] 0.0, 128
    %277 = vxpose.xlu0.b32.cont [13/16] 0.0, 128
    %278 = vxpose.xlu0.b32.cont [14/16] 0.0, 128
    %279 = vxpose.xlu0.b32.cont [15/16] 0.0, 128
    %280 = vxpose.xlu0.b32.end [16/16] 0.0, 128
    %v281 = vpop.trf.xlu0
    %v282 = vpop.trf.xlu0
    %v283 = vpop.trf.xlu0
    %v284 = vpop.trf.xlu0
    %v285 = vpop.trf.xlu0
    %v286 = vpop.trf.xlu0
    %v287 = vpop.trf.xlu0
    %v288 = vpop.trf.xlu0
    %v289 = vpop.trf.xlu0
    %v290 = vpop.trf.xlu0
    %v291 = vpop.trf.xlu0
    %v292 = vpop.trf.xlu0
    %v293 = vpop.trf.xlu0
    %v294 = vpop.trf.xlu0
    %v295 = vpop.trf.xlu0
    %v296 = vpop.trf.xlu0
    %v297 = vpack.c.bf16 %v282, %v281
    %v298 = vpack.c.bf16 %v284, %v283
    %v301 = vunpack.c.l.b16 %v297
    %v302 = vunpack.c.h.b16 %v297
    %v303 = vunpack.c.l.b16 %v298
    %v304 = vunpack.c.h.b16 %v298
    %v305 = vpack.c.b16 %v301, %v301
    %v306 = vpack.c.b16 %v302, %v302
    %v307 = vpack.c.b16 %v303, %v303
    %v308 = vpack.c.b16 %v304, %v304
    %vm313 = vcmask 257024
    %314 = vst.msk [vmem:[#allocation10] sm:$0xf] %vm313, %v305
    %315 = vst.msk [vmem:[#allocation10 + $0x4] sm:$0xf] %vm313, %v306
    %316 = vst.msk [vmem:[#allocation10 + $0x8] sm:$0xf] %vm313, %v307
    %317 = vst.msk [vmem:[#allocation10 + $0xc] sm:$0xf] %vm313, %v308
    %v318 = vpack.c.bf16 %v191, %v188
    %v319 = vpack.c.bf16 %v199, %v196
    %v322 = vunpack.c.l.b16 %v318
    %v323 = vunpack.c.h.b16 %v318
    %v324 = vunpack.c.l.b16 %v319
    %v325 = vunpack.c.h.b16 %v319
    %v326 = vpack.c.b16 %v322, %v322
    %v327 = vpack.c.b16 %v323, %v323
    %v328 = vpack.c.b16 %v324, %v324
    %v329 = vpack.c.b16 %v325, %v325
    %330 = vrot.lane.b32.xlu0 %v326, 96
    %v331 = vpop.permute.xlu0 %330
    %332 = vrot.lane.b32.xlu0 %v327, 96
    %v333 = vpop.permute.xlu0 %332
    %334 = vrot.lane.b32.xlu0 %v328, 96
    %v335 = vpop.permute.xlu0 %334
    %336 = vrot.lane.b32.xlu0 %v329, 96
    %v337 = vpop.permute.xlu0 %336
    %342 = vst.msk [vmem:[#allocation11] sm:$0xf] %vm313, %v331
    %343 = vst.msk [vmem:[#allocation11 + $0x4] sm:$0xf] %vm313, %v333
    %344 = vst.msk [vmem:[#allocation11 + $0x8] sm:$0xf] %vm313, %v335
    %345 = vst.msk [vmem:[#allocation11 + $0xc] sm:$0xf] %vm313, %v337
    // Predicated region
    $region38: #{tpu_custom_call.1} parent=1 // pred_check
      _
    $region39: #{tpu_custom_call.1} parent=1 // pred_check_branch
      %347 = sbr.rel (0) target = $region41
    $region40: #{tpu_custom_call.1} parent=1 // pred_region
      %s349 = ssub.s32 256, 256
      %350 = vsyncadd [#allocation4], %s349
      %s351 = sshll.u32 [#allocation10], 4
      %s352 = int_to_ptr.vmem [resolvable:$true] %s351
      %357 = dma.vmem_to_hbm [thread:$0]  %s352, 256, %s5, [#allocation4], 64, 64, 4
    $region41: #{tpu_custom_call.1} parent=1 // pred_fallthru
      _
    // Predicated region
    $region42: #{tpu_custom_call.1} parent=1 // pred_check
      _
    $region43: #{tpu_custom_call.1} parent=1 // pred_check_branch
      %359 = sbr.rel (0) target = $region45
    $region44: #{tpu_custom_call.1} parent=1 // pred_region
      %s361 = ssub.s32 256, 256
      %362 = vsyncadd [#allocation12], %s361
      %s363 = sshll.u32 [#allocation11], 4
      %s364 = int_to_ptr.vmem [resolvable:$true] %s363
      %369 = dma.vmem_to_hbm [thread:$0]  %s364, 256, %s6, [#allocation12], 64, 64, 4
    $region45: #{tpu_custom_call.1} parent=1 // pred_fallthru
      _
    // Predicated region
    $region46: #{tpu_custom_call.1} parent=1 // pred_check
      _
    $region47: #{tpu_custom_call.1} parent=1 // pred_check_branch
      %371 = sbr.rel (0) target = $region49
    $region48: #{tpu_custom_call.1} parent=1 // pred_region
      %372 = dma.done [#allocation4], 256
    $region49: #{tpu_custom_call.1} parent=1 // pred_fallthru
      _
    // Predicated region
    $region50: #{tpu_custom_call.1} parent=1 // pred_check
      _
    $region51: #{tpu_custom_call.1} parent=1 // pred_check_branch
      %374 = sbr.rel (0) target = $region53
    $region52: #{tpu_custom_call.1} parent=1 // pred_region
      %375 = dma.done [#allocation12], 256
    $region53: #{tpu_custom_call.1} parent=1 // pred_fallthru
      _
    %376 = vsyncpa [#allocation3], 1
    %377 = vsyncpa [#allocation6], 1
    %378 = vsyncpa [#allocation9], 1
    %379 = vsyncpa [#allocation4], 1
    %380 = vsyncpa [#allocation12], 1

</llo_original>
